<compile_context>
chip_gen: v6e
topology: v6e:2x2x1
jax: 0.10.0
libtpu: 0.0.40
codegen_flags: <defaults>
</compile_context>

<pallas_src>
import functools

import jax
import jax.numpy as jnp
from jax.experimental import pallas as pl
from jax.experimental.pallas import tpu as pltpu


def _leaky_relu(x, slope=0.01):
    # max-form: 2 VALU ops (mul, max) vs 3 for where(cmp, x, mul).
    return jnp.maximum(x, slope * x)


def _round_up(x, m):
    return ((x + m - 1) // m) * m


def _num_tensorcores():
    """Best-effort TensorCore count per chip (v7x has 2; v5e/v6e have 1)."""
    try:
        kind = jax.devices()[0].device_kind.lower()
    except Exception:
        return 1
    return 2 if "v7" in kind else 1


def _choose_tiling(B, num_tc, tile_cap):
    """Pick (tile_b, b_pad, grid_n). Only split the grid on multi-TC chips."""
    tile_cap = max(8, _round_up(int(tile_cap), 8))
    if num_tc > 1:
        # Give each TensorCore at least one grid step (megacore sharding).
        tile_b = min(tile_cap, _round_up(pl.cdiv(B, num_tc), 8))
    else:
        # Single TC: the grid is a serial loop -- one big tile when it fits.
        tile_b = min(tile_cap, _round_up(B, 8))
    b_pad = _round_up(B, tile_b)
    grid_n = b_pad // tile_b
    return tile_b, b_pad, grid_n


def entire_estimator_kernel(x_ref, w1_ref, b1_ref, wr_ref, br_ref, wo_ref,
                            bo_ref, out_ref, *, num_final_fcs):
    # x_ref:  (TB, D)      w1_ref: (D, H)       b1_ref: (1, H) f32
    # wr_ref: (L, H, H)    br_ref: (L, 1, H) f32
    # wo_ref: (H, 1)       bo_ref: (1, 1) f32 in SMEM
    # out_ref:(TB, 1) f32
    cd = w1_ref.dtype

    # input2hid: one K=(A+S) matmul (inputs pre-concatenated / pre-cast on host).
    h = jnp.dot(x_ref[...], w1_ref[...], preferred_element_type=jnp.float32)
    h = _leaky_relu(h + b1_ref[...])                       # f32 VPU path

    # Residual stack. Static unroll is fine for a handful of layers; switch to
    # lax.fori_loop(..., unroll=True) if num_final_fcs grows large.
    for i in range(num_final_fcs):
        r = jnp.dot(h.astype(cd), wr_ref[i],
                    preferred_element_type=jnp.float32)
        h = h + _leaky_relu(r + br_ref[i])                 # f32 bias/act/add

    # hid2out: (TB, H) @ (H, 1) -> (TB, 1). No transpose of h needed.
    out = jnp.dot(h.astype(cd), wo_ref[...], preferred_element_type=jnp.float32)
    out_ref[...] = (out + bo_ref[0, 0]).astype(out_ref.dtype)


def entire_estimator_forward(attr_t, sptm_t, params, *, tile_cap=2048,
                             matmul_dtype=jnp.bfloat16, num_tensorcores=None):
    """attr_t: (B, A), sptm_t: (B, S). Returns (B, 1) float32."""
    B, A = attr_t.shape
    Bs, S = sptm_t.shape
    assert B == Bs, "attr_t / sptm_t batch mismatch"
    D = A + S

    w1, b1, wr, br, wo, bo = (params["w1"], params["b1"], params["wr"],
                              params["br"], params["wo"], params["bo"])
    num_final_fcs, H, _ = wr.shape
    assert w1.shape == (D, H)

    # Host-side prep: concat + cast inputs to the MXU dtype (halves input HBM
    # traffic for bf16); cast weights; keep biases in f32; transpose Wo once.
    x = jnp.concatenate([attr_t, sptm_t], axis=1).astype(matmul_dtype)
    w1c = w1.astype(matmul_dtype)
    wrc = wr.astype(matmul_dtype)
    wo_t = wo.T.astype(matmul_dtype)                     # (H, 1)
    b1f = b1.astype(jnp.float32).reshape(1, H)
    brf = br.astype(jnp.float32).reshape(num_final_fcs, 1, H)
    bof = bo.astype(jnp.float32).reshape(1, 1)

    if num_tensorcores is None:
        num_tensorcores = _num_tensorcores()
    tile_b, b_pad, grid_n = _choose_tiling(B, num_tensorcores, tile_cap)

    if b_pad != B:
        # Padded rows produce garbage through the MLP but are sliced off below.
        x = jnp.pad(x, ((0, b_pad - B), (0, 0)))

    kernel = functools.partial(entire_estimator_kernel,
                               num_final_fcs=num_final_fcs)

    wib = jnp.dtype(matmul_dtype).itemsize
    flops = 2 * b_pad * H * (D + num_final_fcs * H + 1)
    bytes_accessed = (b_pad * D * wib                      # inputs (bf16/f32)
                      + b_pad * 4                          # output (f32)
                      + (D * H + num_final_fcs * H * H + H) * wib   # weights
                      + (H + num_final_fcs * H + 1) * 4)   # biases (f32)

    out = pl.pallas_call(
        kernel,
        out_shape=jax.ShapeDtypeStruct((b_pad, 1), jnp.float32),
        grid_spec=pltpu.PrefetchScalarGridSpec(
            num_scalar_prefetch=0,
            grid=(grid_n,),
            in_specs=[
                pl.BlockSpec((tile_b, D), lambda i: (i, 0)),               # x
                pl.BlockSpec((D, H), lambda i: (0, 0)),                    # w1
                pl.BlockSpec((1, H), lambda i: (0, 0)),                    # b1
                pl.BlockSpec((num_final_fcs, H, H), lambda i: (0, 0, 0)),  # wr
                pl.BlockSpec((num_final_fcs, 1, H), lambda i: (0, 0, 0)),  # br
                pl.BlockSpec((H, 1), lambda i: (0, 0)),                    # wo^T
                pl.BlockSpec(memory_space=pltpu.MemorySpace.SMEM),         # bo
            ],
            out_specs=pl.BlockSpec((tile_b, 1), lambda i: (i, 0)),
        ),
        compiler_params=pltpu.CompilerParams(
            dimension_semantics=("parallel",)),
        cost_estimate=pl.CostEstimate(flops=flops, transcendentals=0,
                                      bytes_accessed=bytes_accessed),
    )(x, w1c, b1f, wrc, brf, wo_t, bof)

    return out[:B]


def make_params(key, input_size, num_final_fcs, hidden_size):
    """Deterministic synthetic init (nn.Linear-like uniform fan-in scaling)."""
    keys = jax.random.split(key, 6)

    def uniform(k, shape, fan_in):
        bound = 1.0 / jnp.sqrt(fan_in)
        return jax.random.uniform(k, shape, jnp.float32, -bound, bound)

    return {
        "w1": uniform(keys[0], (input_size, hidden_size), input_size),
        "b1": uniform(keys[1], (1, hidden_size), input_size),
        "wr": uniform(keys[2], (num_final_fcs, hidden_size, hidden_size),
                      hidden_size),
        "br": uniform(keys[3], (num_final_fcs, 1, hidden_size), hidden_size),
        "wo": uniform(keys[4], (1, hidden_size), hidden_size),  # PyTorch layout
        "bo": uniform(keys[5], (1, 1), hidden_size),
    }


def reference_forward(attr_t, sptm_t, params):
    """Pure-JAX f32 reference mirroring the PyTorch module."""
    def leaky(v):
        return jnp.where(v > 0, v, 0.01 * v)
    x = jnp.concatenate([attr_t, sptm_t], axis=1)
    h = leaky(x @ params["w1"] + params["b1"])
    for i in range(params["wr"].shape[0]):
        h = h + leaky(h @ params["wr"][i] + params["br"][i])
    return h @ params["wo"].T + params["bo"]


if __name__ == "__main__":
    # TODO(synk): eval_on_batch (loss/metric helper) is host-side bookkeeping and
    # is intentionally not implemented as a kernel.
    B = 24                 # non-divisible batch: exercises padding (and the
                           # 2-step grid on a dual-TC chip)
    ATTR = 16              # attr_t feature dim
    SPTM = 16              # sptm_t feature dim
    INPUT_SIZE = ATTR + SPTM
    HIDDEN = 128           # module default hidden_size
    NUM_FINAL_FCS = 3

    key = jax.random.PRNGKey(0)
    k_attr, k_sptm, k_params = jax.random.split(key, 3)

    attr_t = jax.random.normal(k_attr, (B, ATTR), jnp.float32)
    sptm_t = jax.random.normal(k_sptm, (B, SPTM), jnp.float32)
    params = make_params(k_params, INPUT_SIZE, NUM_FINAL_FCS, HIDDEN)

    ref = reference_forward(attr_t, sptm_t, params)

    # f32 MXU-input path (default TPU f32 matmul precision may use multi-pass
    # bf16 internally, so allow a small tolerance rather than claim bit-exact).
    out_f32 = entire_estimator_forward(attr_t, sptm_t, params,
                                       matmul_dtype=jnp.float32)
    out_f32 = jax.block_until_ready(out_f32)
    assert out_f32.shape == (B, 1)
    assert jnp.allclose(out_f32, ref, atol=1e-3, rtol=1e-3), "f32 mismatch"

    # Default bf16 MXU-input path (recommended on all generations), f32 accum.
    out_bf16 = entire_estimator_forward(attr_t, sptm_t, params)
    out_bf16 = jax.block_until_ready(out_bf16)
    assert out_bf16.shape == (B, 1)
    assert jnp.allclose(out_bf16, ref, atol=5e-2, rtol=5e-2), "bf16 mismatch"

    print("KERNEL_OK")
</pallas_src>

<mosaic_0001>
module attributes {stable_mosaic.version = 11 : i64} {
  func.func @entire_estimator_kernel(%arg0: i32, %arg1: memref<24x32xf32, #tpu.memory_space<vmem>>, %arg2: memref<32x128xf32, #tpu.memory_space<vmem>>, %arg3: memref<1x128xf32, #tpu.memory_space<vmem>>, %arg4: memref<3x128x128xf32, #tpu.memory_space<vmem>>, %arg5: memref<3x1x128xf32, #tpu.memory_space<vmem>>, %arg6: memref<128x1xf32, #tpu.memory_space<vmem>>, %arg7: memref<1x1xf32, #tpu.memory_space<smem>>, %arg8: memref<24x1xf32, #tpu.memory_space<vmem>>) attributes {dimension_semantics = [#tpu.dimension_semantics<parallel>], iteration_bounds = array<i64: 1>, scalar_prefetch = 0 : i64, scratch_operands = 0 : i64, tpu.core_type = #tpu.core_type<tc>, window_params = [{transform_indices = @transform_0, window_bounds = array<i64: 24, 32>}, {pipeline_mode = #tpu.pipeline_mode<synchronous>, transform_indices = @transform_1, window_bounds = array<i64: 32, 128>}, {pipeline_mode = #tpu.pipeline_mode<synchronous>, transform_indices = @transform_2, window_bounds = array<i64: 1, 128>}, {pipeline_mode = #tpu.pipeline_mode<synchronous>, transform_indices = @transform_3, window_bounds = array<i64: 3, 128, 128>}, {pipeline_mode = #tpu.pipeline_mode<synchronous>, transform_indices = @transform_4, window_bounds = array<i64: 3, 1, 128>}, {pipeline_mode = #tpu.pipeline_mode<synchronous>, transform_indices = @transform_5, window_bounds = array<i64: 128, 1>}, {transform_indices = @transform_6, window_bounds = array<i64: 1, 1>}, {transform_indices = @transform_7, window_bounds = array<i64: 24, 1>}]} {
    %c0 = arith.constant 0 : index
    %c0_0 = arith.constant 0 : index
    %0 = vector.load %arg1[%c0, %c0_0] : memref<24x32xf32, #tpu.memory_space<vmem>>, vector<24x32xf32>
    %c0_1 = arith.constant 0 : index
    %c0_2 = arith.constant 0 : index
    %1 = vector.load %arg2[%c0_1, %c0_2] : memref<32x128xf32, #tpu.memory_space<vmem>>, vector<32x128xf32>
    %cst = arith.constant dense<0.000000e+00> : vector<24x128xf32>
    %2 = tpu.matmul %0, %1, %cst {dimension_numbers = #tpu.dot_dimension_numbers<[1], [0], [0], [1], [0, 0, 1, 1], [], []>} : vector<24x32xf32>, vector<32x128xf32>, vector<24x128xf32> -> vector<24x128xf32>
    %c0_3 = arith.constant 0 : index
    %c0_4 = arith.constant 0 : index
    %3 = vector.load %arg3[%c0_3, %c0_4] : memref<1x128xf32, #tpu.memory_space<vmem>>, vector<1x128xf32>
    %4 = vector.broadcast %3 : vector<1x128xf32> to vector<24x128xf32>
    %5 = arith.addf %2, %4 : vector<24x128xf32>
    %cst_5 = arith.constant 0.00999999977 : f32
    %6 = vector.broadcast %cst_5 : f32 to vector<24x128xf32>
    %7 = arith.mulf %6, %5 : vector<24x128xf32>
    %8 = arith.maximumf %5, %7 : vector<24x128xf32>
    %c0_6 = arith.constant 0 : index
    %c0_7 = arith.constant 0 : index
    %c0_8 = arith.constant 0 : index
    %9 = vector.load %arg4[%c0_6, %c0_7, %c0_8] : memref<3x128x128xf32, #tpu.memory_space<vmem>>, vector<1x128x128xf32>
    %10 = vector.shape_cast %9 : vector<1x128x128xf32> to vector<128x128xf32>
    %cst_9 = arith.constant dense<0.000000e+00> : vector<24x128xf32>
    %11 = tpu.matmul %8, %10, %cst_9 {dimension_numbers = #tpu.dot_dimension_numbers<[1], [0], [0], [1], [0, 0, 1, 1], [], []>} : vector<24x128xf32>, vector<128x128xf32>, vector<24x128xf32> -> vector<24x128xf32>
    %c0_10 = arith.constant 0 : index
    %c0_11 = arith.constant 0 : index
    %c0_12 = arith.constant 0 : index
    %12 = vector.load %arg5[%c0_10, %c0_11, %c0_12] : memref<3x1x128xf32, #tpu.memory_space<vmem>>, vector<1x1x128xf32>
    %13 = vector.shape_cast %12 : vector<1x1x128xf32> to vector<1x128xf32>
    %14 = vector.broadcast %13 : vector<1x128xf32> to vector<24x128xf32>
    %15 = arith.addf %11, %14 : vector<24x128xf32>
    %cst_13 = arith.constant 0.00999999977 : f32
    %16 = vector.broadcast %cst_13 : f32 to vector<24x128xf32>
    %17 = arith.mulf %16, %15 : vector<24x128xf32>
    %18 = arith.maximumf %15, %17 : vector<24x128xf32>
    %19 = arith.addf %8, %18 : vector<24x128xf32>
    %c1 = arith.constant 1 : index
    %c0_14 = arith.constant 0 : index
    %c0_15 = arith.constant 0 : index
    %20 = vector.load %arg4[%c1, %c0_14, %c0_15] : memref<3x128x128xf32, #tpu.memory_space<vmem>>, vector<1x128x128xf32>
    %21 = vector.shape_cast %20 : vector<1x128x128xf32> to vector<128x128xf32>
    %cst_16 = arith.constant dense<0.000000e+00> : vector<24x128xf32>
    %22 = tpu.matmul %19, %21, %cst_16 {dimension_numbers = #tpu.dot_dimension_numbers<[1], [0], [0], [1], [0, 0, 1, 1], [], []>} : vector<24x128xf32>, vector<128x128xf32>, vector<24x128xf32> -> vector<24x128xf32>
    %c1_17 = arith.constant 1 : index
    %c0_18 = arith.constant 0 : index
    %c0_19 = arith.constant 0 : index
    %23 = vector.load %arg5[%c1_17, %c0_18, %c0_19] : memref<3x1x128xf32, #tpu.memory_space<vmem>>, vector<1x1x128xf32>
    %24 = vector.shape_cast %23 : vector<1x1x128xf32> to vector<1x128xf32>
    %25 = vector.broadcast %24 : vector<1x128xf32> to vector<24x128xf32>
    %26 = arith.addf %22, %25 : vector<24x128xf32>
    %cst_20 = arith.constant 0.00999999977 : f32
    %27 = vector.broadcast %cst_20 : f32 to vector<24x128xf32>
    %28 = arith.mulf %27, %26 : vector<24x128xf32>
    %29 = arith.maximumf %26, %28 : vector<24x128xf32>
    %30 = arith.addf %19, %29 : vector<24x128xf32>
    %c2 = arith.constant 2 : index
    %c0_21 = arith.constant 0 : index
    %c0_22 = arith.constant 0 : index
    %31 = vector.load %arg4[%c2, %c0_21, %c0_22] : memref<3x128x128xf32, #tpu.memory_space<vmem>>, vector<1x128x128xf32>
    %32 = vector.shape_cast %31 : vector<1x128x128xf32> to vector<128x128xf32>
    %cst_23 = arith.constant dense<0.000000e+00> : vector<24x128xf32>
    %33 = tpu.matmul %30, %32, %cst_23 {dimension_numbers = #tpu.dot_dimension_numbers<[1], [0], [0], [1], [0, 0, 1, 1], [], []>} : vector<24x128xf32>, vector<128x128xf32>, vector<24x128xf32> -> vector<24x128xf32>
    %c2_24 = arith.constant 2 : index
    %c0_25 = arith.constant 0 : index
    %c0_26 = arith.constant 0 : index
    %34 = vector.load %arg5[%c2_24, %c0_25, %c0_26] : memref<3x1x128xf32, #tpu.memory_space<vmem>>, vector<1x1x128xf32>
    %35 = vector.shape_cast %34 : vector<1x1x128xf32> to vector<1x128xf32>
    %36 = vector.broadcast %35 : vector<1x128xf32> to vector<24x128xf32>
    %37 = arith.addf %33, %36 : vector<24x128xf32>
    %cst_27 = arith.constant 0.00999999977 : f32
    %38 = vector.broadcast %cst_27 : f32 to vector<24x128xf32>
    %39 = arith.mulf %38, %37 : vector<24x128xf32>
    %40 = arith.maximumf %37, %39 : vector<24x128xf32>
    %41 = arith.addf %30, %40 : vector<24x128xf32>
    %c0_28 = arith.constant 0 : index
    %c0_29 = arith.constant 0 : index
    %42 = vector.load %arg6[%c0_28, %c0_29] : memref<128x1xf32, #tpu.memory_space<vmem>>, vector<128x1xf32>
    %cst_30 = arith.constant dense<0.000000e+00> : vector<24x1xf32>
    %43 = tpu.matmul %41, %42, %cst_30 {dimension_numbers = #tpu.dot_dimension_numbers<[1], [0], [0], [1], [0, 0, 1, 1], [], []>} : vector<24x128xf32>, vector<128x1xf32>, vector<24x1xf32> -> vector<24x1xf32>
    %c0_31 = arith.constant 0 : index
    %c0_32 = arith.constant 0 : index
    %44 = memref.load %arg7[%c0_31, %c0_32] : memref<1x1xf32, #tpu.memory_space<smem>>
    %45 = vector.broadcast %44 : f32 to vector<24x1xf32>
    %46 = arith.addf %43, %45 : vector<24x1xf32>
    %c0_33 = arith.constant 0 : index
    %c0_34 = arith.constant 0 : index
    %47 = vector.load %arg8[%c0_33, %c0_34] : memref<24x1xf32, #tpu.memory_space<vmem>>, vector<24x1xf32>
    tpu.vector_store %arg8[%c0_33, %c0_34], %46 {strides = array<i32>} : memref<24x1xf32, #tpu.memory_space<vmem>>, vector<24x1xf32>,
    return
  }
  func.func @transform_0(%arg0: i32) -> (i32, i32) {
    %c0_i32 = arith.constant 0 : i32
    %c0_i32_0 = arith.constant 0 : i32
    return %arg0, %c0_i32 : i32, i32
  }
  func.func @transform_1(%arg0: i32) -> (i32, i32) {
    %c0_i32 = arith.constant 0 : i32
    %c0_i32_0 = arith.constant 0 : i32
    %c0_i32_1 = arith.constant 0 : i32
    return %c0_i32, %c0_i32_0 : i32, i32
  }
  func.func @transform_2(%arg0: i32) -> (i32, i32) {
    %c0_i32 = arith.constant 0 : i32
    %c0_i32_0 = arith.constant 0 : i32
    %c0_i32_1 = arith.constant 0 : i32
    return %c0_i32, %c0_i32_0 : i32, i32
  }
  func.func @transform_3(%arg0: i32) -> (i32, i32, i32) {
    %c0_i32 = arith.constant 0 : i32
    %c0_i32_0 = arith.constant 0 : i32
    %c0_i32_1 = arith.constant 0 : i32
    %c0_i32_2 = arith.constant 0 : i32
    return %c0_i32, %c0_i32_0, %c0_i32_1 : i32, i32, i32
  }
  func.func @transform_4(%arg0: i32) -> (i32, i32, i32) {
    %c0_i32 = arith.constant 0 : i32
    %c0_i32_0 = arith.constant 0 : i32
    %c0_i32_1 = arith.constant 0 : i32
    %c0_i32_2 = arith.constant 0 : i32
    return %c0_i32, %c0_i32_0, %c0_i32_1 : i32, i32, i32
  }
  func.func @transform_5(%arg0: i32) -> (i32, i32) {
    %c0_i32 = arith.constant 0 : i32
    %c0_i32_0 = arith.constant 0 : i32
    %c0_i32_1 = arith.constant 0 : i32
    return %c0_i32, %c0_i32_0 : i32, i32
  }
  func.func @transform_6(%arg0: i32) -> (i32, i32) {
    %c0_i32 = arith.constant 0 : i32
    %c0_i32_0 = arith.constant 0 : i32
    %c0_i32_1 = arith.constant 0 : i32
    return %c0_i32, %c0_i32_0 : i32, i32
  }
  func.func @transform_7(%arg0: i32) -> (i32, i32) {
    %c0_i32 = arith.constant 0 : i32
    %c0_i32_0 = arith.constant 0 : i32
    return %arg0, %c0_i32 : i32, i32
  }
}

</mosaic_0001>

<llo_original>
// kernel: tpu_custom_call.1
$region0: #{tpu_custom_call.1}
  #allocation0 [shape = 'u32[]', space=smem, size = 0x4, offset = 0x4, fixed_abs, tag = 'smem constant byte address 0x4 - core index']
  #allocation1 [shape = 'u32[144,128]{1,0:T(1,128)}', space=vmem, size = 0x12000, scoped, tag = 'internal scratch']
  #allocation2 [shape = 'f32[1,1]{1,0:T(1,128)S(6)}', space=smem, size = 0x200, scoped, tag = 'scoped memory for tpu_custom_call.1']
  %s0 = inlined_call_operand.vmem [shape: f32[24,32], index: 0, kind: input, shape index: {}]
  %s1 = inlined_call_operand.vmem [shape: f32[32,128], index: 1, kind: input, shape index: {}]
  %s2 = inlined_call_operand.vmem [shape: f32[1,128], index: 2, kind: input, shape index: {}]
  %s3 = inlined_call_operand.hbm [shape: f32[3,128,128], index: 3, kind: input, shape index: {}]
  %s4 = inlined_call_operand.vmem [shape: f32[3,1,128], index: 4, kind: input, shape index: {}]
  %s5 = inlined_call_operand.vmem [shape: f32[128,1], index: 5, kind: input, shape index: {}]
  %s6 = inlined_call_operand.<no memory space> [shape: f32[1,1], index: 6, kind: input, shape index: {}]
  %s7 = inlined_call_operand.vmem [shape: f32[24,1], index: 7, kind: output, shape index: {}]
  %s8 = sld [smem:[#allocation0]]
  $region42: #{tpu_custom_call.1} parent=0
    _
  %s10 = ssub.s32 1, %s8
  %s11 = scalar_select 0, %s10, %s8
  %12 = sst [smem:[#allocation2]] %s6
  $region1: #{tpu_custom_call.1} parent=0
    #allocation3 [shape = 'u8[196608]{0}', space=vmem, size = 0x30000, scoped, tag = 'input window, operand 3, single buffered']
    #allocation4 [shape = 's32[1]{0}', space=sflag, size = 0x4, scoped, tag = 'scoped memory for tpu_custom_call.1']
    %13 = vsyncpa [#allocation4], 0
    // Predicated region
    $region2: #{tpu_custom_call.1} parent=1 // pred_check
      _
    $region3: #{tpu_custom_call.1} parent=1 // pred_check_branch
      %15 = sbr.rel (0) target = $region5
    $region4: #{tpu_custom_call.1} parent=1 // pred_region
      _
    $region5: #{tpu_custom_call.1} parent=1 // pred_fallthru
      _
    // Predicated region
    $region6: #{tpu_custom_call.1} parent=1 // pred_check
      _
    $region7: #{tpu_custom_call.1} parent=1 // pred_check_branch
      %17 = sbr.rel (0) target = $region9
    $region8: #{tpu_custom_call.1} parent=1 // pred_region
      _
    $region9: #{tpu_custom_call.1} parent=1 // pred_fallthru
      _
    // Predicated region
    $region10: #{tpu_custom_call.1} parent=1 // pred_check
      _
    $region11: #{tpu_custom_call.1} parent=1 // pred_check_branch
      %19 = sbr.rel (0) target = $region13
    $region12: #{tpu_custom_call.1} parent=1 // pred_region
      _
    $region13: #{tpu_custom_call.1} parent=1 // pred_fallthru
      _
    // Predicated region
    $region14: #{tpu_custom_call.1} parent=1 // pred_check
      _
    $region15: #{tpu_custom_call.1} parent=1 // pred_check_branch
      %21 = sbr.rel (0) target = $region17
    $region16: #{tpu_custom_call.1} parent=1 // pred_region
      %s23 = ssub.s32 6144, 6144
      %24 = vsyncadd [#allocation4], %s23
      %s25 = sshll.u32 [#allocation3], 4
      %s26 = int_to_ptr.vmem [resolvable:$true] %s25
      %31 = dma.hbm_to_vmem [thread:$0]  %s3, 6144, %s26, [#allocation4], 128, 128, 8
    $region17: #{tpu_custom_call.1} parent=1 // pred_fallthru
      _
    // Predicated region
    $region18: #{tpu_custom_call.1} parent=1 // pred_check
      _
    $region19: #{tpu_custom_call.1} parent=1 // pred_check_branch
      %33 = sbr.rel (0) target = $region21
    $region20: #{tpu_custom_call.1} parent=1 // pred_region
      _
    $region21: #{tpu_custom_call.1} parent=1 // pred_fallthru
      _
    // Predicated region
    $region22: #{tpu_custom_call.1} parent=1 // pred_check
      _
    $region23: #{tpu_custom_call.1} parent=1 // pred_check_branch
      %35 = sbr.rel (0) target = $region25
    $region24: #{tpu_custom_call.1} parent=1 // pred_region
      _
    $region25: #{tpu_custom_call.1} parent=1 // pred_fallthru
      _
    // Predicated region
    $region26: #{tpu_custom_call.1} parent=1 // pred_check
      _
    $region27: #{tpu_custom_call.1} parent=1 // pred_check_branch
      %37 = sbr.rel (0) target = $region29
    $region28: #{tpu_custom_call.1} parent=1 // pred_region
      _
    $region29: #{tpu_custom_call.1} parent=1 // pred_fallthru
      _
    // Predicated region
    $region30: #{tpu_custom_call.1} parent=1 // pred_check
      _
    $region31: #{tpu_custom_call.1} parent=1 // pred_check_branch
      %39 = sbr.rel (0) target = $region33
    $region32: #{tpu_custom_call.1} parent=1 // pred_region
      %40 = dma.done [#allocation4], 6144
    $region33: #{tpu_custom_call.1} parent=1 // pred_fallthru
      _
    %v41 = vld [vmem:[%s0] sm:$0xff]
    %v42 = vld [vmem:[%s0 + $0x8] sm:$0xff]
    %v43 = vld [vmem:[%s0 + $0x10] sm:$0xff]
    %v44 = vld [vmem:[%s1] sm:$0xff]
    %v45 = vld [vmem:[%s1 + $0x8] sm:$0xff]
    %v46 = vld [vmem:[%s1 + $0x10] sm:$0xff]
    %v47 = vld [vmem:[%s1 + $0x18] sm:$0xff]
    %v48 = vld [vmem:[%s2] sm:$0x1]
    %v50 = vlaneseq
    %v51 = vshrl.u32 %v50, 7
    %v52 = vsub.s32 0, %v51
    %v53 = vrot.slane %v48, %v52
    %vm55 = vcmask 261120
    %v57 = vsel %vm55, %v41, 0
    %v60 = vsel %vm55, %v42, 0
    %v63 = vsel %vm55, %v43, 0
    %65 = vmatprep.subr.mxu0 0.0
    %66 = vmatpush1.msra.mxu0 0.0
    %67 = vmatprep.subr.mxu0 0.0
    %68 = vmatpush1.msra.mxu0 0.0
    %69 = vmatprep.subr.mxu0 0.0
    %70 = vmatpush1.msra.mxu0 0.0
    %71 = vmatprep.subr.mxu0 0.0
    %72 = vmatpush1.msra.mxu0 0.0
    %73 = vmatprep.subr.mxu0 0.0
    %74 = vmatpush1.msra.mxu0 0.0
    %75 = vmatprep.subr.mxu0 0.0
    %76 = vmatpush1.msra.mxu0 0.0
    %77 = vmatprep.subr.mxu0 0.0
    %78 = vmatpush1.msra.mxu0 0.0
    %79 = vmatprep.subr.mxu0 0.0
    %80 = vmatpush1.msra.mxu0 0.0
    %81 = vmatprep.subr.mxu0 0.0
    %82 = vmatpush1.msra.mxu0 0.0
    %83 = vmatprep.subr.mxu0 0.0
    %84 = vmatpush1.msra.mxu0 0.0
    %85 = vmatprep.subr.mxu0 0.0
    %86 = vmatpush1.msra.mxu0 0.0
    %87 = vmatprep.subr.mxu0 0.0
    %88 = vmatpush1.msra.mxu0 0.0
    %89 = vmatprep.subr.mxu0 0.0
    %90 = vmatpush1.msra.mxu0 %v47
    %91 = vmatprep.subr.mxu0 0.0
    %92 = vmatpush1.msra.mxu0 %v46
    %93 = vmatprep.subr.mxu0 0.0
    %94 = vmatpush1.msra.mxu0 %v45
    %95 = vmatprep.subr.mxu0 0.0
    %96 = vmatpush1.msra.mxu0 %v44
    %97 = vmatprep.subr.mxu0 0.0
    %98 = vmatpush2.msra.mxu0 0.0
    %99 = vmatprep.subr.mxu0 0.0
    %100 = vmatpush2.msra.mxu0 0.0
    %101 = vmatprep.subr.mxu0 0.0
    %102 = vmatpush2.msra.mxu0 0.0
    %103 = vmatprep.subr.mxu0 0.0
    %104 = vmatpush2.msra.mxu0 0.0
    %105 = vmatprep.subr.mxu0 0.0
    %106 = vmatpush2.msra.mxu0 0.0
    %107 = vmatprep.subr.mxu0 0.0
    %108 = vmatpush2.msra.mxu0 0.0
    %109 = vmatprep.subr.mxu0 0.0
    %110 = vmatpush2.msra.mxu0 0.0
    %111 = vmatprep.subr.mxu0 0.0
    %112 = vmatpush2.msra.mxu0 0.0
    %113 = vmatprep.subr.mxu0 0.0
    %114 = vmatpush2.msra.mxu0 0.0
    %115 = vmatprep.subr.mxu0 0.0
    %116 = vmatpush2.msra.mxu0 0.0
    %117 = vmatprep.subr.mxu0 0.0
    %118 = vmatpush2.msra.mxu0 0.0
    %119 = vmatprep.subr.mxu0 0.0
    %120 = vmatpush2.msra.mxu0 0.0
    %121 = vmatprep.subr.mxu0 0.0
    %122 = vmatpush2.msra.mxu0 0.0
    %123 = vmatprep.subr.mxu0 0.0
    %124 = vmatpush2.msra.mxu0 0.0
    %125 = vmatprep.subr.mxu0 0.0
    %126 = vmatpush2.msra.mxu0 0.0
    %127 = vmatprep.subr.mxu0 0.0
    %128 = vmatpush2.msra.mxu0 0.0
    %129 = vmatprep.mubr.f32.mxu0 0.0
    %130 = vmatmul.mubr.f32.gmra.mxu0 %v57
    %v131 = vpop.f32.mrf.mxu0
    %v132 = vadd.f32 %v53, %v131
    %v133 = vpop.f32.mrf.mxu0
    %134 = vmatprep.mubr.f32.mxu0 0.0
    %135 = vmatmul.mubr.f32.gmra.mxu0 %v60
    %v136 = vpop.f32.mrf.mxu0
    %v137 = vadd.f32 %v53, %v136
    %v138 = vpop.f32.mrf.mxu0
    %139 = vmatprep.mubr.f32.mxu0 0.0
    %140 = vmatmul.mubr.f32.gmra.mxu0 %v63
    %v141 = vpop.f32.mrf.mxu0
    %v142 = vadd.f32 %v53, %v141
    %v143 = vpop.f32.mrf.mxu0
    %144 = vdwg.mxu0
    %v145 = vmul.f32 %v132, 0.01
    %v146 = vmul.f32 %v137, 0.01
    %v147 = vmul.f32 %v142, 0.01
    %v148 = vmax.f32 %v132, %v145
    %v149 = vmax.f32 %v137, %v146
    %v150 = vmax.f32 %v142, %v147
    %v151 = vld [vmem:[#allocation3] sm:$0xff]
    %v152 = vld [vmem:[#allocation3 + $0x8] sm:$0xff]
    %v153 = vld [vmem:[#allocation3 + $0x10] sm:$0xff]
    %v154 = vld [vmem:[#allocation3 + $0x18] sm:$0xff]
    %v155 = vld [vmem:[#allocation3 + $0x20] sm:$0xff]
    %v156 = vld [vmem:[#allocation3 + $0x28] sm:$0xff]
    %v157 = vld [vmem:[#allocation3 + $0x30] sm:$0xff]
    %v158 = vld [vmem:[#allocation3 + $0x38] sm:$0xff]
    %v159 = vld [vmem:[#allocation3 + $0x40] sm:$0xff]
    %v160 = vld [vmem:[#allocation3 + $0x48] sm:$0xff]
    %v161 = vld [vmem:[#allocation3 + $0x50] sm:$0xff]
    %v162 = vld [vmem:[#allocation3 + $0x58] sm:$0xff]
    %v163 = vld [vmem:[#allocation3 + $0x60] sm:$0xff]
    %v164 = vld [vmem:[#allocation3 + $0x68] sm:$0xff]
    %v165 = vld [vmem:[#allocation3 + $0x70] sm:$0xff]
    %v166 = vld [vmem:[#allocation3 + $0x78] sm:$0xff]
    %v167 = vld [vmem:[%s4] sm:$0x1]
    %v169 = vlaneseq
    %v170 = vshrl.u32 %v169, 7
    %v171 = vsub.s32 0, %v170
    %v172 = vrot.slane %v167, %v171
    %174 = vmatprep.subr.mxu0 0.0
    %175 = vmatpush1.msra.mxu0 %v166
    %176 = vmatprep.subr.mxu0 0.0
    %177 = vmatpush1.msra.mxu0 %v165
    %178 = vmatprep.subr.mxu0 0.0
    %179 = vmatpush1.msra.mxu0 %v164
    %180 = vmatprep.subr.mxu0 0.0
    %181 = vmatpush1.msra.mxu0 %v163
    %182 = vmatprep.subr.mxu0 0.0
    %183 = vmatpush1.msra.mxu0 %v162
    %184 = vmatprep.subr.mxu0 0.0
    %185 = vmatpush1.msra.mxu0 %v161
    %186 = vmatprep.subr.mxu0 0.0
    %187 = vmatpush1.msra.mxu0 %v160
    %188 = vmatprep.subr.mxu0 0.0
    %189 = vmatpush1.msra.mxu0 %v159
    %190 = vmatprep.subr.mxu0 0.0
    %191 = vmatpush1.msra.mxu0 %v158
    %192 = vmatprep.subr.mxu0 0.0
    %193 = vmatpush1.msra.mxu0 %v157
    %194 = vmatprep.subr.mxu0 0.0
    %195 = vmatpush1.msra.mxu0 %v156
    %196 = vmatprep.subr.mxu0 0.0
    %197 = vmatpush1.msra.mxu0 %v155
    %198 = vmatprep.subr.mxu0 0.0
    %199 = vmatpush1.msra.mxu0 %v154
    %200 = vmatprep.subr.mxu0 0.0
    %201 = vmatpush1.msra.mxu0 %v153
    %202 = vmatprep.subr.mxu0 0.0
    %203 = vmatpush1.msra.mxu0 %v152
    %204 = vmatprep.subr.mxu0 0.0
    %205 = vmatpush1.msra.mxu0 %v151
    %206 = vmatprep.subr.mxu0 0.0
    %207 = vmatpush2.msra.mxu0 0.0
    %208 = vmatprep.subr.mxu0 0.0
    %209 = vmatpush2.msra.mxu0 0.0
    %210 = vmatprep.subr.mxu0 0.0
    %211 = vmatpush2.msra.mxu0 0.0
    %212 = vmatprep.subr.mxu0 0.0
    %213 = vmatpush2.msra.mxu0 0.0
    %214 = vmatprep.subr.mxu0 0.0
    %215 = vmatpush2.msra.mxu0 0.0
    %216 = vmatprep.subr.mxu0 0.0
    %217 = vmatpush2.msra.mxu0 0.0
    %218 = vmatprep.subr.mxu0 0.0
    %219 = vmatpush2.msra.mxu0 0.0
    %220 = vmatprep.subr.mxu0 0.0
    %221 = vmatpush2.msra.mxu0 0.0
    %222 = vmatprep.subr.mxu0 0.0
    %223 = vmatpush2.msra.mxu0 0.0
    %224 = vmatprep.subr.mxu0 0.0
    %225 = vmatpush2.msra.mxu0 0.0
    %226 = vmatprep.subr.mxu0 0.0
    %227 = vmatpush2.msra.mxu0 0.0
    %228 = vmatprep.subr.mxu0 0.0
    %229 = vmatpush2.msra.mxu0 0.0
    %230 = vmatprep.subr.mxu0 0.0
    %231 = vmatpush2.msra.mxu0 0.0
    %232 = vmatprep.subr.mxu0 0.0
    %233 = vmatpush2.msra.mxu0 0.0
    %234 = vmatprep.subr.mxu0 0.0
    %235 = vmatpush2.msra.mxu0 0.0
    %236 = vmatprep.subr.mxu0 0.0
    %237 = vmatpush2.msra.mxu0 0.0
    %238 = vmatprep.mubr.f32.mxu0 0.0
    %239 = vmatmul.mubr.f32.gmra.mxu0 %v148
    %v240 = vpop.f32.mrf.mxu0
    %v241 = vadd.f32 %v172, %v240
    %v242 = vpop.f32.mrf.mxu0
    %243 = vmatprep.mubr.f32.mxu0 0.0
    %244 = vmatmul.mubr.f32.gmra.mxu0 %v149
    %v245 = vpop.f32.mrf.mxu0
    %v246 = vadd.f32 %v172, %v245
    %v247 = vpop.f32.mrf.mxu0
    %248 = vmatprep.mubr.f32.mxu0 0.0
    %249 = vmatmul.mubr.f32.gmra.mxu0 %v150
    %v250 = vpop.f32.mrf.mxu0
    %v251 = vadd.f32 %v172, %v250
    %v252 = vpop.f32.mrf.mxu0
    %253 = vdwg.mxu0
    %v254 = vmul.f32 %v241, 0.01
    %v255 = vmul.f32 %v246, 0.01
    %v256 = vmul.f32 %v251, 0.01
    %v257 = vmax.f32 %v241, %v254
    %v258 = vmax.f32 %v246, %v255
    %v259 = vmax.f32 %v251, %v256
    %v260 = vadd.f32 %v148, %v257
    %v261 = vadd.f32 %v149, %v258
    %v262 = vadd.f32 %v150, %v259
    %s263 = scalar_lea.vmem [#allocation3], 128
    %v264 = vld [vmem:[%s263] sm:$0xff]
    %v265 = vld [vmem:[%s263 + $0x8] sm:$0xff]
    %v266 = vld [vmem:[%s263 + $0x10] sm:$0xff]
    %v267 = vld [vmem:[%s263 + $0x18] sm:$0xff]
    %v268 = vld [vmem:[%s263 + $0x20] sm:$0xff]
    %v269 = vld [vmem:[%s263 + $0x28] sm:$0xff]
    %v270 = vld [vmem:[%s263 + $0x30] sm:$0xff]
    %v271 = vld [vmem:[%s263 + $0x38] sm:$0xff]
    %v272 = vld [vmem:[%s263 + $0x40] sm:$0xff]
    %v273 = vld [vmem:[%s263 + $0x48] sm:$0xff]
    %v274 = vld [vmem:[%s263 + $0x50] sm:$0xff]
    %v275 = vld [vmem:[%s263 + $0x58] sm:$0xff]
    %v276 = vld [vmem:[%s263 + $0x60] sm:$0xff]
    %v277 = vld [vmem:[%s263 + $0x68] sm:$0xff]
    %v278 = vld [vmem:[%s263 + $0x70] sm:$0xff]
    %v279 = vld [vmem:[%s263 + $0x78] sm:$0xff]
    %s280 = scalar_lea.vmem %s4, 1
    %v281 = vld [vmem:[%s280] sm:$0x1]
    %v283 = vlaneseq
    %v284 = vshrl.u32 %v283, 7
    %v285 = vsub.s32 0, %v284
    %v286 = vrot.slane %v281, %v285
    %288 = vmatprep.subr.mxu0 0.0
    %289 = vmatpush1.msra.mxu0 %v279
    %290 = vmatprep.subr.mxu0 0.0
    %291 = vmatpush1.msra.mxu0 %v278
    %292 = vmatprep.subr.mxu0 0.0
    %293 = vmatpush1.msra.mxu0 %v277
    %294 = vmatprep.subr.mxu0 0.0
    %295 = vmatpush1.msra.mxu0 %v276
    %296 = vmatprep.subr.mxu0 0.0
    %297 = vmatpush1.msra.mxu0 %v275
    %298 = vmatprep.subr.mxu0 0.0
    %299 = vmatpush1.msra.mxu0 %v274
    %300 = vmatprep.subr.mxu0 0.0
    %301 = vmatpush1.msra.mxu0 %v273
    %302 = vmatprep.subr.mxu0 0.0
    %303 = vmatpush1.msra.mxu0 %v272
    %304 = vmatprep.subr.mxu0 0.0
    %305 = vmatpush1.msra.mxu0 %v271
    %306 = vmatprep.subr.mxu0 0.0
    %307 = vmatpush1.msra.mxu0 %v270
    %308 = vmatprep.subr.mxu0 0.0
    %309 = vmatpush1.msra.mxu0 %v269
    %310 = vmatprep.subr.mxu0 0.0
    %311 = vmatpush1.msra.mxu0 %v268
    %312 = vmatprep.subr.mxu0 0.0
    %313 = vmatpush1.msra.mxu0 %v267
    %314 = vmatprep.subr.mxu0 0.0
    %315 = vmatpush1.msra.mxu0 %v266
    %316 = vmatprep.subr.mxu0 0.0
    %317 = vmatpush1.msra.mxu0 %v265
    %318 = vmatprep.subr.mxu0 0.0
    %319 = vmatpush1.msra.mxu0 %v264
    %320 = vmatprep.subr.mxu0 0.0
    %321 = vmatpush2.msra.mxu0 0.0
    %322 = vmatprep.subr.mxu0 0.0
    %323 = vmatpush2.msra.mxu0 0.0
    %324 = vmatprep.subr.mxu0 0.0
    %325 = vmatpush2.msra.mxu0 0.0
    %326 = vmatprep.subr.mxu0 0.0
    %327 = vmatpush2.msra.mxu0 0.0
    %328 = vmatprep.subr.mxu0 0.0
    %329 = vmatpush2.msra.mxu0 0.0
    %330 = vmatprep.subr.mxu0 0.0
    %331 = vmatpush2.msra.mxu0 0.0
    %332 = vmatprep.subr.mxu0 0.0
    %333 = vmatpush2.msra.mxu0 0.0
    %334 = vmatprep.subr.mxu0 0.0
    %335 = vmatpush2.msra.mxu0 0.0
    %336 = vmatprep.subr.mxu0 0.0
    %337 = vmatpush2.msra.mxu0 0.0
    %338 = vmatprep.subr.mxu0 0.0
    %339 = vmatpush2.msra.mxu0 0.0
    %340 = vmatprep.subr.mxu0 0.0
    %341 = vmatpush2.msra.mxu0 0.0
    %342 = vmatprep.subr.mxu0 0.0
    %343 = vmatpush2.msra.mxu0 0.0
    %344 = vmatprep.subr.mxu0 0.0
    %345 = vmatpush2.msra.mxu0 0.0
    %346 = vmatprep.subr.mxu0 0.0
    %347 = vmatpush2.msra.mxu0 0.0
    %348 = vmatprep.subr.mxu0 0.0
    %349 = vmatpush2.msra.mxu0 0.0
    %350 = vmatprep.subr.mxu0 0.0
    %351 = vmatpush2.msra.mxu0 0.0
    %352 = vmatprep.mubr.f32.mxu0 0.0
    %353 = vmatmul.mubr.f32.gmra.mxu0 %v260
    %v354 = vpop.f32.mrf.mxu0
    %v355 = vadd.f32 %v286, %v354
    %v356 = vpop.f32.mrf.mxu0
    %357 = vmatprep.mubr.f32.mxu0 0.0
    %358 = vmatmul.mubr.f32.gmra.mxu0 %v261
    %v359 = vpop.f32.mrf.mxu0
    %v360 = vadd.f32 %v286, %v359
    %v361 = vpop.f32.mrf.mxu0
    %362 = vmatprep.mubr.f32.mxu0 0.0
    %363 = vmatmul.mubr.f32.gmra.mxu0 %v262
    %v364 = vpop.f32.mrf.mxu0
    %v365 = vadd.f32 %v286, %v364
    %v366 = vpop.f32.mrf.mxu0
    %367 = vdwg.mxu0
    %v368 = vmul.f32 %v355, 0.01
    %v369 = vmul.f32 %v360, 0.01
    %v370 = vmul.f32 %v365, 0.01
    %v371 = vmax.f32 %v355, %v368
    %v372 = vmax.f32 %v360, %v369
    %v373 = vmax.f32 %v365, %v370
    %v374 = vadd.f32 %v260, %v371
    %v375 = vadd.f32 %v261, %v372
    %v376 = vadd.f32 %v262, %v373
    %s377 = scalar_lea.vmem [#allocation3], 256
    %v378 = vld [vmem:[%s377] sm:$0xff]
    %v379 = vld [vmem:[%s377 + $0x8] sm:$0xff]
    %v380 = vld [vmem:[%s377 + $0x10] sm:$0xff]
    %v381 = vld [vmem:[%s377 + $0x18] sm:$0xff]
    %v382 = vld [vmem:[%s377 + $0x20] sm:$0xff]
    %v383 = vld [vmem:[%s377 + $0x28] sm:$0xff]
    %v384 = vld [vmem:[%s377 + $0x30] sm:$0xff]
    %v385 = vld [vmem:[%s377 + $0x38] sm:$0xff]
    %v386 = vld [vmem:[%s377 + $0x40] sm:$0xff]
    %v387 = vld [vmem:[%s377 + $0x48] sm:$0xff]
    %v388 = vld [vmem:[%s377 + $0x50] sm:$0xff]
    %v389 = vld [vmem:[%s377 + $0x58] sm:$0xff]
    %v390 = vld [vmem:[%s377 + $0x60] sm:$0xff]
    %v391 = vld [vmem:[%s377 + $0x68] sm:$0xff]
    %v392 = vld [vmem:[%s377 + $0x70] sm:$0xff]
    %v393 = vld [vmem:[%s377 + $0x78] sm:$0xff]
    %s394 = scalar_lea.vmem %s4, 2
    %v395 = vld [vmem:[%s394] sm:$0x1]
    %v397 = vlaneseq
    %v398 = vshrl.u32 %v397, 7
    %v399 = vsub.s32 0, %v398
    %v400 = vrot.slane %v395, %v399
    %402 = vmatprep.subr.mxu0 0.0
    %403 = vmatpush1.msra.mxu0 %v393
    %404 = vmatprep.subr.mxu0 0.0
    %405 = vmatpush1.msra.mxu0 %v392
    %406 = vmatprep.subr.mxu0 0.0
    %407 = vmatpush1.msra.mxu0 %v391
    %408 = vmatprep.subr.mxu0 0.0
    %409 = vmatpush1.msra.mxu0 %v390
    %410 = vmatprep.subr.mxu0 0.0
    %411 = vmatpush1.msra.mxu0 %v389
    %412 = vmatprep.subr.mxu0 0.0
    %413 = vmatpush1.msra.mxu0 %v388
    %414 = vmatprep.subr.mxu0 0.0
    %415 = vmatpush1.msra.mxu0 %v387
    %416 = vmatprep.subr.mxu0 0.0
    %417 = vmatpush1.msra.mxu0 %v386
    %418 = vmatprep.subr.mxu0 0.0
    %419 = vmatpush1.msra.mxu0 %v385
    %420 = vmatprep.subr.mxu0 0.0
    %421 = vmatpush1.msra.mxu0 %v384
    %422 = vmatprep.subr.mxu0 0.0
    %423 = vmatpush1.msra.mxu0 %v383
    %424 = vmatprep.subr.mxu0 0.0
    %425 = vmatpush1.msra.mxu0 %v382
    %426 = vmatprep.subr.mxu0 0.0
    %427 = vmatpush1.msra.mxu0 %v381
    %428 = vmatprep.subr.mxu0 0.0
    %429 = vmatpush1.msra.mxu0 %v380
    %430 = vmatprep.subr.mxu0 0.0
    %431 = vmatpush1.msra.mxu0 %v379
    %432 = vmatprep.subr.mxu0 0.0
    %433 = vmatpush1.msra.mxu0 %v378
    %434 = vmatprep.subr.mxu0 0.0
    %435 = vmatpush2.msra.mxu0 0.0
    %436 = vmatprep.subr.mxu0 0.0
    %437 = vmatpush2.msra.mxu0 0.0
    %438 = vmatprep.subr.mxu0 0.0
    %439 = vmatpush2.msra.mxu0 0.0
    %440 = vmatprep.subr.mxu0 0.0
    %441 = vmatpush2.msra.mxu0 0.0
    %442 = vmatprep.subr.mxu0 0.0
    %443 = vmatpush2.msra.mxu0 0.0
    %444 = vmatprep.subr.mxu0 0.0
    %445 = vmatpush2.msra.mxu0 0.0
    %446 = vmatprep.subr.mxu0 0.0
    %447 = vmatpush2.msra.mxu0 0.0
    %448 = vmatprep.subr.mxu0 0.0
    %449 = vmatpush2.msra.mxu0 0.0
    %450 = vmatprep.subr.mxu0 0.0
    %451 = vmatpush2.msra.mxu0 0.0
    %452 = vmatprep.subr.mxu0 0.0
    %453 = vmatpush2.msra.mxu0 0.0
    %454 = vmatprep.subr.mxu0 0.0
    %455 = vmatpush2.msra.mxu0 0.0
    %456 = vmatprep.subr.mxu0 0.0
    %457 = vmatpush2.msra.mxu0 0.0
    %458 = vmatprep.subr.mxu0 0.0
    %459 = vmatpush2.msra.mxu0 0.0
    %460 = vmatprep.subr.mxu0 0.0
    %461 = vmatpush2.msra.mxu0 0.0
    %462 = vmatprep.subr.mxu0 0.0
    %463 = vmatpush2.msra.mxu0 0.0
    %464 = vmatprep.subr.mxu0 0.0
    %465 = vmatpush2.msra.mxu0 0.0
    %466 = vmatprep.mubr.f32.mxu0 0.0
    %467 = vmatmul.mubr.f32.gmra.mxu0 %v374
    %v468 = vpop.f32.mrf.mxu0
    %v469 = vadd.f32 %v400, %v468
    %v470 = vpop.f32.mrf.mxu0
    %471 = vmatprep.mubr.f32.mxu0 0.0
    %472 = vmatmul.mubr.f32.gmra.mxu0 %v375
    %v473 = vpop.f32.mrf.mxu0
    %v474 = vadd.f32 %v400, %v473
    %v475 = vpop.f32.mrf.mxu0
    %476 = vmatprep.mubr.f32.mxu0 0.0
    %477 = vmatmul.mubr.f32.gmra.mxu0 %v376
    %v478 = vpop.f32.mrf.mxu0
    %v479 = vadd.f32 %v400, %v478
    %v480 = vpop.f32.mrf.mxu0
    %481 = vdwg.mxu0
    %v482 = vmul.f32 %v469, 0.01
    %v483 = vmul.f32 %v474, 0.01
    %v484 = vmul.f32 %v479, 0.01
    %v485 = vmax.f32 %v469, %v482
    %v486 = vmax.f32 %v474, %v483
    %v487 = vmax.f32 %v479, %v484
    %v488 = vadd.f32 %v374, %v485
    %v489 = vadd.f32 %v375, %v486
    %v490 = vadd.f32 %v376, %v487
    %v491 = vld [vmem:[%s5] sm:$0xff]
    %v492 = vld [vmem:[%s5 + $0x8] sm:$0xff]
    %v493 = vld [vmem:[%s5 + $0x10] sm:$0xff]
    %v494 = vld [vmem:[%s5 + $0x18] sm:$0xff]
    %v495 = vld [vmem:[%s5 + $0x20] sm:$0xff]
    %v496 = vld [vmem:[%s5 + $0x28] sm:$0xff]
    %v497 = vld [vmem:[%s5 + $0x30] sm:$0xff]
    %v498 = vld [vmem:[%s5 + $0x38] sm:$0xff]
    %v499 = vld [vmem:[%s5 + $0x40] sm:$0xff]
    %v500 = vld [vmem:[%s5 + $0x48] sm:$0xff]
    %v501 = vld [vmem:[%s5 + $0x50] sm:$0xff]
    %v502 = vld [vmem:[%s5 + $0x58] sm:$0xff]
    %v503 = vld [vmem:[%s5 + $0x60] sm:$0xff]
    %v504 = vld [vmem:[%s5 + $0x68] sm:$0xff]
    %v505 = vld [vmem:[%s5 + $0x70] sm:$0xff]
    %v506 = vld [vmem:[%s5 + $0x78] sm:$0xff]
    %s507 = sld [smem:[#allocation2]]
    %v508 = vstv %s507
    %509 = vmatprep.subr.mxu0 0.0
    %510 = vmatpush1.msra.mxu0 %v506
    %511 = vmatprep.subr.mxu0 0.0
    %512 = vmatpush1.msra.mxu0 %v505
    %513 = vmatprep.subr.mxu0 0.0
    %514 = vmatpush1.msra.mxu0 %v504
    %515 = vmatprep.subr.mxu0 0.0
    %516 = vmatpush1.msra.mxu0 %v503
    %517 = vmatprep.subr.mxu0 0.0
    %518 = vmatpush1.msra.mxu0 %v502
    %519 = vmatprep.subr.mxu0 0.0
    %520 = vmatpush1.msra.mxu0 %v501
    %521 = vmatprep.subr.mxu0 0.0
    %522 = vmatpush1.msra.mxu0 %v500
    %523 = vmatprep.subr.mxu0 0.0
    %524 = vmatpush1.msra.mxu0 %v499
    %525 = vmatprep.subr.mxu0 0.0
    %526 = vmatpush1.msra.mxu0 %v498
    %527 = vmatprep.subr.mxu0 0.0
    %528 = vmatpush1.msra.mxu0 %v497
    %529 = vmatprep.subr.mxu0 0.0
    %530 = vmatpush1.msra.mxu0 %v496
    %531 = vmatprep.subr.mxu0 0.0
    %532 = vmatpush1.msra.mxu0 %v495
    %533 = vmatprep.subr.mxu0 0.0
    %534 = vmatpush1.msra.mxu0 %v494
    %535 = vmatprep.subr.mxu0 0.0
    %536 = vmatpush1.msra.mxu0 %v493
    %537 = vmatprep.subr.mxu0 0.0
    %538 = vmatpush1.msra.mxu0 %v492
    %539 = vmatprep.subr.mxu0 0.0
    %540 = vmatpush1.msra.mxu0 %v491
    %541 = vmatprep.subr.mxu0 0.0
    %542 = vmatpush2.msra.mxu0 0.0
    %543 = vmatprep.subr.mxu0 0.0
    %544 = vmatpush2.msra.mxu0 0.0
    %545 = vmatprep.subr.mxu0 0.0
    %546 = vmatpush2.msra.mxu0 0.0
    %547 = vmatprep.subr.mxu0 0.0
    %548 = vmatpush2.msra.mxu0 0.0
    %549 = vmatprep.subr.mxu0 0.0
    %550 = vmatpush2.msra.mxu0 0.0
    %551 = vmatprep.subr.mxu0 0.0
    %552 = vmatpush2.msra.mxu0 0.0
    %553 = vmatprep.subr.mxu0 0.0
    %554 = vmatpush2.msra.mxu0 0.0
    %555 = vmatprep.subr.mxu0 0.0
    %556 = vmatpush2.msra.mxu0 0.0
    %557 = vmatprep.subr.mxu0 0.0
    %558 = vmatpush2.msra.mxu0 0.0
    %559 = vmatprep.subr.mxu0 0.0
    %560 = vmatpush2.msra.mxu0 0.0
    %561 = vmatprep.subr.mxu0 0.0
    %562 = vmatpush2.msra.mxu0 0.0
    %563 = vmatprep.subr.mxu0 0.0
    %564 = vmatpush2.msra.mxu0 0.0
    %565 = vmatprep.subr.mxu0 0.0
    %566 = vmatpush2.msra.mxu0 0.0
    %567 = vmatprep.subr.mxu0 0.0
    %568 = vmatpush2.msra.mxu0 0.0
    %569 = vmatprep.subr.mxu0 0.0
    %570 = vmatpush2.msra.mxu0 0.0
    %571 = vmatprep.subr.mxu0 0.0
    %572 = vmatpush2.msra.mxu0 0.0
    %573 = vmatprep.mubr.f32.mxu0 0.0
    %574 = vmatmul.mubr.f32.gmra.mxu0 %v488
    %v575 = vpop.f32.mrf.mxu0
    %v576 = vadd.f32 %v508, %v575
    %v577 = vpop.f32.mrf.mxu0
    %578 = vmatprep.mubr.f32.mxu0 0.0
    %579 = vmatmul.mubr.f32.gmra.mxu0 %v489
    %v580 = vpop.f32.mrf.mxu0
    %v581 = vadd.f32 %v508, %v580
    %v582 = vpop.f32.mrf.mxu0
    %583 = vmatprep.mubr.f32.mxu0 0.0
    %584 = vmatmul.mubr.f32.gmra.mxu0 %v490
    %v585 = vpop.f32.mrf.mxu0
    %v586 = vadd.f32 %v508, %v585
    %v587 = vpop.f32.mrf.mxu0
    %588 = vdwg.mxu0
    %vm589 = vcmask 7168
    %590 = vst.msk [vmem:[%s7] sm:$0xff] %vm589, %v576
    %591 = vst.msk [vmem:[%s7 + $0x8] sm:$0xff] %vm589, %v581
    %592 = vst.msk [vmem:[%s7 + $0x10] sm:$0xff] %vm589, %v586
    // Predicated region
    $region34: #{tpu_custom_call.1} parent=1 // pred_check
      _
    $region35: #{tpu_custom_call.1} parent=1 // pred_check_branch
      %594 = sbr.rel (0) target = $region37
    $region36: #{tpu_custom_call.1} parent=1 // pred_region
      _
    $region37: #{tpu_custom_call.1} parent=1 // pred_fallthru
      _
    // Predicated region
    $region38: #{tpu_custom_call.1} parent=1 // pred_check
      _
    $region39: #{tpu_custom_call.1} parent=1 // pred_check_branch
      %596 = sbr.rel (0) target = $region41
    $region40: #{tpu_custom_call.1} parent=1 // pred_region
      _
    $region41: #{tpu_custom_call.1} parent=1 // pred_fallthru
      _
    %597 = vsyncpa [#allocation4], 1

</llo_original>
